<compile_context>
chip_gen: v5e
topology: v5e:2x2
jax: 0.10.0
libtpu: 0.0.40
codegen_flags: <defaults>
</compile_context>

<pallas_src>
import functools

import jax
import jax.numpy as jnp
from jax.experimental import pallas as pl
from jax.experimental.pallas import tpu as pltpu


def _qnet_kernel(s_ref, a_ref, r_ref, t_ref,
                 w1_ref, b1_ref, w2_ref, b2_ref, w3_ref, b3_ref,
                 o_ref):
    # s/a/t: [TM, 1]  r: [TM, R]
    # w1: [2+R+1, H] f32   b1: [1, H] f32
    # w2: [H, H]  bf16     b2: [1, H] f32
    # w3: [H, 1]  bf16     b3: [1, 1] f32
    # o : [TM, 1] f32
    reward_dim = r_ref.shape[1]

    # ---- Layer 1: fused concat, tiny K -> VPU broadcast MACs (no MXU pass) ----
    w1 = w1_ref[...]                                   # [Din, H] f32
    h1 = s_ref[...] * w1[0:1, :]                       # [TM,1]*[1,H] -> [TM,H]
    h1 = h1 + a_ref[...] * w1[1:2, :]
    for j in range(reward_dim):                        # unrolled at trace time
        h1 = h1 + r_ref[:, j:j + 1] * w1[2 + j:3 + j, :]
    h1 = h1 + t_ref[...] * w1[2 + reward_dim:3 + reward_dim, :]
    h1 = jnp.maximum(h1 + b1_ref[...], 0.0)            # bias + ReLU in f32

    # ---- Layer 2: HxH matmul on the MXU, bf16 inputs / f32 accumulate ----
    h2 = jnp.dot(h1.astype(jnp.bfloat16), w2_ref[...],
                 preferred_element_type=jnp.float32) + b2_ref[...]
    h2 = jnp.maximum(h2, 0.0)

    # ---- Layer 3: H -> 1 ----
    q = jnp.dot(h2.astype(jnp.bfloat16), w3_ref[...],
                preferred_element_type=jnp.float32) + b3_ref[...]
    o_ref[...] = q.astype(o_ref.dtype)


@functools.partial(jax.jit, static_argnames=("block_batch",))
def qnetwork_forward(state, action, racc, t, params, *, block_batch=512):
    """Pallas implementation of QNetwork.forward.

    state:  [B, 1], action: [B, 1], racc: [B, reward_dim], t: [B, 1]
    returns q_value: [B, 1]
    """
    w1, b1, w2, b2, w3, b3 = params
    B = state.shape[0]
    R = racc.shape[1]
    Din, H = w1.shape
    assert Din == 2 + R + 1

    state = state.astype(jnp.float32)
    action = action.astype(jnp.float32)
    racc = racc.astype(jnp.float32)
    t = t.astype(jnp.float32)

    # bf16 weights for the MXU layers (one-time tiny cast, halves weight DMA);
    # layer-1 weights stay f32 since they run on the VPU.
    w1 = w1.astype(jnp.float32)
    w2_bf = w2.astype(jnp.bfloat16)
    w3_bf = w3.astype(jnp.bfloat16)
    b1 = b1.astype(jnp.float32)
    b2 = b2.astype(jnp.float32)
    b3 = b3.astype(jnp.float32)

    # Batch tile: full batch if it fits, else block_batch (multiple of 8).
    tm = B if B <= block_batch else block_batch
    grid = (pl.cdiv(B, tm),)

    def row_spec(c):          # pipelined per batch tile
        return pl.BlockSpec((tm, c), lambda i: (i, 0))

    def resident(shape):      # weights/biases: same block every step -> VMEM-resident
        return pl.BlockSpec(shape, lambda i: (0, 0))

    out = pl.pallas_call(
        _qnet_kernel,
        out_shape=jax.ShapeDtypeStruct((B, 1), jnp.float32),
        grid=grid,
        in_specs=[
            row_spec(1),          # state
            row_spec(1),          # action
            row_spec(R),          # racc
            row_spec(1),          # t
            resident((Din, H)),   # w1 (f32)
            resident((1, H)),     # b1
            resident((H, H)),     # w2 (bf16)
            resident((1, H)),     # b2
            resident((H, 1)),     # w3 (bf16)
            resident((1, 1)),     # b3
        ],
        out_specs=row_spec(1),
        compiler_params=pltpu.CompilerParams(
            dimension_semantics=("parallel",),   # v7x: shard batch tiles across 2 TCs
            vmem_limit_bytes=32 << 20,
        ),
    )(state, action, racc, t, w1, b1, w2_bf, b2, w3_bf, b3)
    return out


def init_params(key, reward_dim, hidden_dim=128):
    """Deterministic init mimicking nn.Linear (uniform +-1/sqrt(fan_in))."""
    din = 1 + 1 + reward_dim + 1
    k1, k2, k3, k4, k5, k6 = jax.random.split(key, 6)

    def lin(kw, kb, fan_in, fan_out):
        bound = 1.0 / jnp.sqrt(fan_in)
        w = jax.random.uniform(kw, (fan_in, fan_out), jnp.float32, -bound, bound)
        b = jax.random.uniform(kb, (1, fan_out), jnp.float32, -bound, bound)
        return w, b

    w1, b1 = lin(k1, k2, din, hidden_dim)
    w2, b2 = lin(k3, k4, hidden_dim, hidden_dim)
    w3, b3 = lin(k5, k6, hidden_dim, 1)
    return (w1, b1, w2, b2, w3, b3)


def _reference_forward_f32(state, action, racc, t, params):
    w1, b1, w2, b2, w3, b3 = params
    x = jnp.concatenate([state, action, racc, t], axis=-1)
    h1 = jnp.maximum(x @ w1 + b1, 0.0)
    h2 = jnp.maximum(h1 @ w2 + b2, 0.0)
    return h2 @ w3 + b3


def _reference_forward_matched(state, action, racc, t, params):
    # Same math / dtypes as the kernel (bf16 MXU inputs, f32 accumulate).
    w1, b1, w2, b2, w3, b3 = params
    x = jnp.concatenate([state, action, racc, t], axis=-1)
    h1 = jnp.maximum(x @ w1 + b1, 0.0)
    h2 = jnp.dot(h1.astype(jnp.bfloat16), w2.astype(jnp.bfloat16),
                 preferred_element_type=jnp.float32) + b2
    h2 = jnp.maximum(h2, 0.0)
    return jnp.dot(h2.astype(jnp.bfloat16), w3.astype(jnp.bfloat16),
                   preferred_element_type=jnp.float32) + b3


if __name__ == "__main__":
    key = jax.random.PRNGKey(0)
    batch, reward_dim, hidden_dim = 16, 4, 128

    kp, ks, ka, kr, kt = jax.random.split(key, 5)
    params = init_params(kp, reward_dim, hidden_dim)

    state = jax.random.normal(ks, (batch, 1), jnp.float32)
    action = jax.random.normal(ka, (batch, 1), jnp.float32)
    racc = jax.random.normal(kr, (batch, reward_dim), jnp.float32)
    t = jax.random.normal(kt, (batch, 1), jnp.float32)

    # Small block_batch so the test exercises the batch grid / pipelining.
    q = qnetwork_forward(state, action, racc, t, params, block_batch=8)
    jax.block_until_ready(q)
    assert q.shape == (batch, 1)

    # Tight check vs a precision-matched reference, loose check vs pure-f32 ref.
    q_matched = _reference_forward_matched(state, action, racc, t, params)
    q_f32 = _reference_forward_f32(state, action, racc, t, params)
    assert jnp.allclose(q, q_matched, atol=1e-3, rtol=1e-3)
    assert jnp.allclose(q, q_f32, atol=5e-2, rtol=5e-2)

    print("KERNEL_OK")
</pallas_src>

<mosaic_0001>
module attributes {stable_mosaic.version = 11 : i64} {
  func.func @_qnet_kernel(%arg0: i32, %arg1: memref<8x1xf32, #tpu.memory_space<vmem>>, %arg2: memref<8x1xf32, #tpu.memory_space<vmem>>, %arg3: memref<8x4xf32, #tpu.memory_space<vmem>>, %arg4: memref<8x1xf32, #tpu.memory_space<vmem>>, %arg5: memref<7x128xf32, #tpu.memory_space<vmem>>, %arg6: memref<1x128xf32, #tpu.memory_space<vmem>>, %arg7: memref<128x128xbf16, #tpu.memory_space<vmem>>, %arg8: memref<1x128xf32, #tpu.memory_space<vmem>>, %arg9: memref<128x1xbf16, #tpu.memory_space<vmem>>, %arg10: memref<1x1xf32, #tpu.memory_space<vmem>>, %arg11: memref<8x1xf32, #tpu.memory_space<vmem>>) attributes {dimension_semantics = [#tpu.dimension_semantics<parallel>], iteration_bounds = array<i64: 2>, scalar_prefetch = 0 : i64, scratch_operands = 0 : i64, tpu.core_type = #tpu.core_type<tc>, window_params = [{transform_indices = @transform_0, window_bounds = array<i64: 8, 1>}, {transform_indices = @transform_1, window_bounds = array<i64: 8, 1>}, {transform_indices = @transform_2, window_bounds = array<i64: 8, 4>}, {transform_indices = @transform_3, window_bounds = array<i64: 8, 1>}, {pipeline_mode = #tpu.pipeline_mode<synchronous>, transform_indices = @transform_4, window_bounds = array<i64: 7, 128>}, {pipeline_mode = #tpu.pipeline_mode<synchronous>, transform_indices = @transform_5, window_bounds = array<i64: 1, 128>}, {pipeline_mode = #tpu.pipeline_mode<synchronous>, transform_indices = @transform_6, window_bounds = array<i64: 128, 128>}, {pipeline_mode = #tpu.pipeline_mode<synchronous>, transform_indices = @transform_7, window_bounds = array<i64: 1, 128>}, {pipeline_mode = #tpu.pipeline_mode<synchronous>, transform_indices = @transform_8, window_bounds = array<i64: 128, 1>}, {pipeline_mode = #tpu.pipeline_mode<synchronous>, transform_indices = @transform_9, window_bounds = array<i64: 1, 1>}, {transform_indices = @transform_10, window_bounds = array<i64: 8, 1>}]} {
    %c0 = arith.constant 0 : index
    %c0_0 = arith.constant 0 : index
    %0 = vector.load %arg5[%c0, %c0_0] : memref<7x128xf32, #tpu.memory_space<vmem>>, vector<7x128xf32>
    %c0_1 = arith.constant 0 : index
    %c0_2 = arith.constant 0 : index
    %1 = vector.load %arg1[%c0_1, %c0_2] : memref<8x1xf32, #tpu.memory_space<vmem>>, vector<8x1xf32>
    %2 = vector.extract_strided_slice %0 {offsets = [0, 0], sizes = [1, 128], strides = [1, 1]} : vector<7x128xf32> to vector<1x128xf32>
    %3 = vector.broadcast %1 : vector<8x1xf32> to vector<8x128xf32>
    %4 = vector.broadcast %2 : vector<1x128xf32> to vector<8x128xf32>
    %5 = arith.mulf %3, %4 : vector<8x128xf32>
    %c0_3 = arith.constant 0 : index
    %c0_4 = arith.constant 0 : index
    %6 = vector.load %arg2[%c0_3, %c0_4] : memref<8x1xf32, #tpu.memory_space<vmem>>, vector<8x1xf32>
    %7 = vector.extract_strided_slice %0 {offsets = [1, 0], sizes = [1, 128], strides = [1, 1]} : vector<7x128xf32> to vector<1x128xf32>
    %8 = vector.broadcast %6 : vector<8x1xf32> to vector<8x128xf32>
    %9 = vector.broadcast %7 : vector<1x128xf32> to vector<8x128xf32>
    %10 = arith.mulf %8, %9 : vector<8x128xf32>
    %11 = arith.addf %5, %10 : vector<8x128xf32>
    %c0_5 = arith.constant 0 : index
    %c0_6 = arith.constant 0 : index
    %12 = vector.load %arg3[%c0_5, %c0_6] : memref<8x4xf32, #tpu.memory_space<vmem>>, vector<8x1xf32>
    %13 = vector.extract_strided_slice %0 {offsets = [2, 0], sizes = [1, 128], strides = [1, 1]} : vector<7x128xf32> to vector<1x128xf32>
    %14 = vector.broadcast %12 : vector<8x1xf32> to vector<8x128xf32>
    %15 = vector.broadcast %13 : vector<1x128xf32> to vector<8x128xf32>
    %16 = arith.mulf %14, %15 : vector<8x128xf32>
    %17 = arith.addf %11, %16 : vector<8x128xf32>
    %c0_7 = arith.constant 0 : index
    %c1 = arith.constant 1 : index
    %18 = vector.load %arg3[%c0_7, %c1] : memref<8x4xf32, #tpu.memory_space<vmem>>, vector<8x1xf32>
    %19 = vector.extract_strided_slice %0 {offsets = [3, 0], sizes = [1, 128], strides = [1, 1]} : vector<7x128xf32> to vector<1x128xf32>
    %20 = vector.broadcast %18 : vector<8x1xf32> to vector<8x128xf32>
    %21 = vector.broadcast %19 : vector<1x128xf32> to vector<8x128xf32>
    %22 = arith.mulf %20, %21 : vector<8x128xf32>
    %23 = arith.addf %17, %22 : vector<8x128xf32>
    %c0_8 = arith.constant 0 : index
    %c2 = arith.constant 2 : index
    %24 = vector.load %arg3[%c0_8, %c2] : memref<8x4xf32, #tpu.memory_space<vmem>>, vector<8x1xf32>
    %25 = vector.extract_strided_slice %0 {offsets = [4, 0], sizes = [1, 128], strides = [1, 1]} : vector<7x128xf32> to vector<1x128xf32>
    %26 = vector.broadcast %24 : vector<8x1xf32> to vector<8x128xf32>
    %27 = vector.broadcast %25 : vector<1x128xf32> to vector<8x128xf32>
    %28 = arith.mulf %26, %27 : vector<8x128xf32>
    %29 = arith.addf %23, %28 : vector<8x128xf32>
    %c0_9 = arith.constant 0 : index
    %c3 = arith.constant 3 : index
    %30 = vector.load %arg3[%c0_9, %c3] : memref<8x4xf32, #tpu.memory_space<vmem>>, vector<8x1xf32>
    %31 = vector.extract_strided_slice %0 {offsets = [5, 0], sizes = [1, 128], strides = [1, 1]} : vector<7x128xf32> to vector<1x128xf32>
    %32 = vector.broadcast %30 : vector<8x1xf32> to vector<8x128xf32>
    %33 = vector.broadcast %31 : vector<1x128xf32> to vector<8x128xf32>
    %34 = arith.mulf %32, %33 : vector<8x128xf32>
    %35 = arith.addf %29, %34 : vector<8x128xf32>
    %c0_10 = arith.constant 0 : index
    %c0_11 = arith.constant 0 : index
    %36 = vector.load %arg4[%c0_10, %c0_11] : memref<8x1xf32, #tpu.memory_space<vmem>>, vector<8x1xf32>
    %37 = vector.extract_strided_slice %0 {offsets = [6, 0], sizes = [1, 128], strides = [1, 1]} : vector<7x128xf32> to vector<1x128xf32>
    %38 = vector.broadcast %36 : vector<8x1xf32> to vector<8x128xf32>
    %39 = vector.broadcast %37 : vector<1x128xf32> to vector<8x128xf32>
    %40 = arith.mulf %38, %39 : vector<8x128xf32>
    %41 = arith.addf %35, %40 : vector<8x128xf32>
    %c0_12 = arith.constant 0 : index
    %c0_13 = arith.constant 0 : index
    %42 = vector.load %arg6[%c0_12, %c0_13] : memref<1x128xf32, #tpu.memory_space<vmem>>, vector<1x128xf32>
    %43 = vector.broadcast %42 : vector<1x128xf32> to vector<8x128xf32>
    %44 = arith.addf %41, %43 : vector<8x128xf32>
    %cst = arith.constant 0.000000e+00 : f32
    %45 = vector.broadcast %cst : f32 to vector<8x128xf32>
    %46 = arith.maximumf %44, %45 : vector<8x128xf32>
    %47 = arith.truncf %46 : vector<8x128xf32> to vector<8x128xbf16>
    %c0_14 = arith.constant 0 : index
    %c0_15 = arith.constant 0 : index
    %48 = vector.load %arg7[%c0_14, %c0_15] : memref<128x128xbf16, #tpu.memory_space<vmem>>, vector<128x128xbf16>
    %cst_16 = arith.constant dense<0.000000e+00> : vector<8x128xf32>
    %49 = tpu.matmul %47, %48, %cst_16 {dimension_numbers = #tpu.dot_dimension_numbers<[1], [0], [0], [1], [0, 0, 1, 1], [], []>} : vector<8x128xbf16>, vector<128x128xbf16>, vector<8x128xf32> -> vector<8x128xf32>
    %c0_17 = arith.constant 0 : index
    %c0_18 = arith.constant 0 : index
    %50 = vector.load %arg8[%c0_17, %c0_18] : memref<1x128xf32, #tpu.memory_space<vmem>>, vector<1x128xf32>
    %51 = vector.broadcast %50 : vector<1x128xf32> to vector<8x128xf32>
    %52 = arith.addf %49, %51 : vector<8x128xf32>
    %cst_19 = arith.constant 0.000000e+00 : f32
    %53 = vector.broadcast %cst_19 : f32 to vector<8x128xf32>
    %54 = arith.maximumf %52, %53 : vector<8x128xf32>
    %55 = arith.truncf %54 : vector<8x128xf32> to vector<8x128xbf16>
    %c0_20 = arith.constant 0 : index
    %c0_21 = arith.constant 0 : index
    %56 = vector.load %arg9[%c0_20, %c0_21] : memref<128x1xbf16, #tpu.memory_space<vmem>>, vector<128x1xbf16>
    %cst_22 = arith.constant dense<0.000000e+00> : vector<8x1xf32>
    %57 = tpu.matmul %55, %56, %cst_22 {dimension_numbers = #tpu.dot_dimension_numbers<[1], [0], [0], [1], [0, 0, 1, 1], [], []>} : vector<8x128xbf16>, vector<128x1xbf16>, vector<8x1xf32> -> vector<8x1xf32>
    %c0_23 = arith.constant 0 : index
    %c0_24 = arith.constant 0 : index
    %58 = vector.load %arg10[%c0_23, %c0_24] : memref<1x1xf32, #tpu.memory_space<vmem>>, vector<1x1xf32>
    %59 = vector.broadcast %58 : vector<1x1xf32> to vector<8x1xf32>
    %60 = arith.addf %57, %59 : vector<8x1xf32>
    %c0_25 = arith.constant 0 : index
    %c0_26 = arith.constant 0 : index
    %61 = vector.load %arg11[%c0_25, %c0_26] : memref<8x1xf32, #tpu.memory_space<vmem>>, vector<8x1xf32>
    tpu.vector_store %arg11[%c0_25, %c0_26], %60 {strides = array<i32>} : memref<8x1xf32, #tpu.memory_space<vmem>>, vector<8x1xf32>,
    return
  }
  func.func @transform_0(%arg0: i32) -> (i32, i32) {
    %c0_i32 = arith.constant 0 : i32
    %c0_i32_0 = arith.constant 0 : i32
    return %arg0, %c0_i32 : i32, i32
  }
  func.func @transform_1(%arg0: i32) -> (i32, i32) {
    %c0_i32 = arith.constant 0 : i32
    %c0_i32_0 = arith.constant 0 : i32
    return %arg0, %c0_i32 : i32, i32
  }
  func.func @transform_2(%arg0: i32) -> (i32, i32) {
    %c0_i32 = arith.constant 0 : i32
    %c0_i32_0 = arith.constant 0 : i32
    return %arg0, %c0_i32 : i32, i32
  }
  func.func @transform_3(%arg0: i32) -> (i32, i32) {
    %c0_i32 = arith.constant 0 : i32
    %c0_i32_0 = arith.constant 0 : i32
    return %arg0, %c0_i32 : i32, i32
  }
  func.func @transform_4(%arg0: i32) -> (i32, i32) {
    %c0_i32 = arith.constant 0 : i32
    %c0_i32_0 = arith.constant 0 : i32
    %c0_i32_1 = arith.constant 0 : i32
    return %c0_i32, %c0_i32_0 : i32, i32
  }
  func.func @transform_5(%arg0: i32) -> (i32, i32) {
    %c0_i32 = arith.constant 0 : i32
    %c0_i32_0 = arith.constant 0 : i32
    %c0_i32_1 = arith.constant 0 : i32
    return %c0_i32, %c0_i32_0 : i32, i32
  }
  func.func @transform_6(%arg0: i32) -> (i32, i32) {
    %c0_i32 = arith.constant 0 : i32
    %c0_i32_0 = arith.constant 0 : i32
    %c0_i32_1 = arith.constant 0 : i32
    return %c0_i32, %c0_i32_0 : i32, i32
  }
  func.func @transform_7(%arg0: i32) -> (i32, i32) {
    %c0_i32 = arith.constant 0 : i32
    %c0_i32_0 = arith.constant 0 : i32
    %c0_i32_1 = arith.constant 0 : i32
    return %c0_i32, %c0_i32_0 : i32, i32
  }
  func.func @transform_8(%arg0: i32) -> (i32, i32) {
    %c0_i32 = arith.constant 0 : i32
    %c0_i32_0 = arith.constant 0 : i32
    %c0_i32_1 = arith.constant 0 : i32
    return %c0_i32, %c0_i32_0 : i32, i32
  }
  func.func @transform_9(%arg0: i32) -> (i32, i32) {
    %c0_i32 = arith.constant 0 : i32
    %c0_i32_0 = arith.constant 0 : i32
    %c0_i32_1 = arith.constant 0 : i32
    return %c0_i32, %c0_i32_0 : i32, i32
  }
  func.func @transform_10(%arg0: i32) -> (i32, i32) {
    %c0_i32 = arith.constant 0 : i32
    %c0_i32_0 = arith.constant 0 : i32
    return %arg0, %c0_i32 : i32, i32
  }
}

</mosaic_0001>

<llo_original>
// kernel: qnetwork_forward.1
$region0: #{qnetwork_forward.1}
  #allocation0 [shape = 'u32[]', space=smem, size = 0x4, offset = 0x4, fixed_abs, tag = 'smem constant byte address 0x4 - core index']
  #allocation1 [shape = 'u32[72,128]{1,0:T(1,128)}', space=vmem, size = 0x9000, scoped, tag = 'internal scratch']
  #allocation2 [shape = 'f32[1,1]{1,0:T(1,128)S(1)}', space=vmem, size = 0x200, scoped, tag = 'scoped memory for qnetwork_forward.1']
  %s0 = inlined_call_operand.vmem [shape: f32[16,1], index: 0, kind: input, shape index: {}]
  %s1 = inlined_call_operand.vmem [shape: f32[16,1], index: 1, kind: input, shape index: {}]
  %s2 = inlined_call_operand.vmem [shape: f32[16,4], index: 2, kind: input, shape index: {}]
  %s3 = inlined_call_operand.vmem [shape: f32[16,1], index: 3, kind: input, shape index: {}]
  %s4 = inlined_call_operand.vmem [shape: f32[7,128], index: 4, kind: input, shape index: {}]
  %s5 = inlined_call_operand.vmem [shape: f32[1,128], index: 5, kind: input, shape index: {}]
  %s6 = inlined_call_operand.vmem [shape: bf16[128,128], index: 6, kind: input, shape index: {}]
  %s7 = inlined_call_operand.vmem [shape: f32[1,128], index: 7, kind: input, shape index: {}]
  %s8 = inlined_call_operand.vmem [shape: bf16[128,1], index: 8, kind: input, shape index: {}]
  %s9 = inlined_call_operand.<no memory space> [shape: f32[1,1], index: 9, kind: input, shape index: {}]
  %s10 = inlined_call_operand.vmem [shape: f32[16,1], index: 10, kind: output, shape index: {}]
  %s11 = sld [smem:[#allocation0]]
  $region73: #{qnetwork_forward.1} parent=0
    _
  %s13 = ssub.s32 1, %s11
  %s14 = scalar_select 0, %s13, %s11
  %v15 = vstv %s9
  %16 = vst [vmem:[#allocation2] sm:$0x1] %v15
  loop: start=0, step=1, limit=4
  $region2: #{qnetwork_forward.1} parent=0 // loop_pre_header
    _
  $region3: #{qnetwork_forward.1} parent=0 // loop_header
    %s18 = sphi 0, %s22
    %p19 = scmp.ge.s32.totalorder %s18, 4
    %s28 = sphi 0, %s30
    %s31 = sphi 0, %s28
    %s32 = sphi 0, %s31
    %s48 = sphi 0, %s32
    %s54 = sphi 0, %s56
    %s57 = sphi 0, %s54
    %s58 = sphi 0, %s57
    %s74 = sphi 0, %s58
    %s80 = sphi 0, %s82
    %s83 = sphi 0, %s80
    %s84 = sphi 0, %s83
    %s100 = sphi 0, %s84
    %s106 = sphi 0, %s108
    %s109 = sphi 0, %s106
    %s110 = sphi 0, %s109
    %s126 = sphi 0, %s110
    %s130 = sphi 0, %s130
    %s132 = sphi 0, %s130
    %s133 = sphi 0, %s132
    %s147 = sphi 0, %s133
    %s151 = sphi 0, %s151
    %s153 = sphi 0, %s151
    %s154 = sphi 0, %s153
    %s168 = sphi 0, %s154
    %s172 = sphi 0, %s172
    %s174 = sphi 0, %s172
    %s175 = sphi 0, %s174
    %s189 = sphi 0, %s175
    %s193 = sphi 0, %s193
    %s195 = sphi 0, %s193
    %s196 = sphi 0, %s195
    %s210 = sphi 0, %s196
    %s214 = sphi 0, %s214
    %s216 = sphi 0, %s214
    %s217 = sphi 0, %s216
    %s231 = sphi 0, %s217
    %s235 = sphi 0, %s235
    %s237 = sphi 0, %s235
    %s238 = sphi 0, %s237
    %s252 = sphi 0, %s238
    %s258 = sphi 0, %s260
    %s261 = sphi 0, %s258
    %s262 = sphi 0, %s261
    %s278 = sphi 0, %s262
  $region4: #{qnetwork_forward.1} parent=0 // loop_header_branch
    %21 = sbr.rel (%p19) target = $region8
  $region5: #{qnetwork_forward.1} parent=0 // loop_body
    %s23 = ssub.s32 %s18, 1
    %s24 = ssub.s32 %s18, 2
    %s25 = sadd.s32 %s18, 1
    %s26 = ssub.s32 %s18, %s25
    %p27 = scmp.eq.s32.totalorder %s26, 0
    %s29 = sadd.s32 %s28, 1
    %s30 = scalar_select %p27, %s28, %s29
    %p33 = pneg %p27
    %p34 = scmp.eq.s32.totalorder %s18, 1
    %p35 = por %p33, %p34
    %p36 = scmp.ne.s32.totalorder %s28, %s31
    %p37 = scmp.eq.s32.totalorder %s18, 0
    %p38 = por %p36, %p37
    %p39 = scmp.ne.s32.totalorder %s28, %s31
    %p40 = scmp.eq.s32.totalorder %s23, 1
    %p41 = por %p39, %p40
    %p42 = scmp.ne.s32.totalorder %s31, %s32
    %p43 = scmp.eq.s32.totalorder %s23, 0
    %p44 = por %p42, %p43
    %p45 = scmp.ne.s32.totalorder %s31, %s32
    %p46 = scmp.eq.s32.totalorder %s24, 1
    %p47 = por %p45, %p46
    %p49 = scmp.ne.s32.totalorder %s32, %s48
    %p50 = scmp.eq.s32.totalorder %s24, 0
    %p51 = por %p49, %p50
    %s52 = ssub.s32 %s18, %s25
    %p53 = scmp.eq.s32.totalorder %s52, 0
    %s55 = sadd.s32 %s54, 1
    %s56 = scalar_select %p53, %s54, %s55
    %p59 = pneg %p53
    %p60 = scmp.eq.s32.totalorder %s18, 1
    %p61 = por %p59, %p60
    %p62 = scmp.ne.s32.totalorder %s54, %s57
    %p63 = scmp.eq.s32.totalorder %s18, 0
    %p64 = por %p62, %p63
    %p65 = scmp.ne.s32.totalorder %s54, %s57
    %p66 = scmp.eq.s32.totalorder %s23, 1
    %p67 = por %p65, %p66
    %p68 = scmp.ne.s32.totalorder %s57, %s58
    %p69 = scmp.eq.s32.totalorder %s23, 0
    %p70 = por %p68, %p69
    %p71 = scmp.ne.s32.totalorder %s57, %s58
    %p72 = scmp.eq.s32.totalorder %s24, 1
    %p73 = por %p71, %p72
    %p75 = scmp.ne.s32.totalorder %s58, %s74
    %p76 = scmp.eq.s32.totalorder %s24, 0
    %p77 = por %p75, %p76
    %s78 = ssub.s32 %s18, %s25
    %p79 = scmp.eq.s32.totalorder %s78, 0
    %s81 = sadd.s32 %s80, 1
    %s82 = scalar_select %p79, %s80, %s81
    %p85 = pneg %p79
    %p86 = scmp.eq.s32.totalorder %s18, 1
    %p87 = por %p85, %p86
    %p88 = scmp.ne.s32.totalorder %s80, %s83
    %p89 = scmp.eq.s32.totalorder %s18, 0
    %p90 = por %p88, %p89
    %p91 = scmp.ne.s32.totalorder %s80, %s83
    %p92 = scmp.eq.s32.totalorder %s23, 1
    %p93 = por %p91, %p92
    %p94 = scmp.ne.s32.totalorder %s83, %s84
    %p95 = scmp.eq.s32.totalorder %s23, 0
    %p96 = por %p94, %p95
    %p97 = scmp.ne.s32.totalorder %s83, %s84
    %p98 = scmp.eq.s32.totalorder %s24, 1
    %p99 = por %p97, %p98
    %p101 = scmp.ne.s32.totalorder %s84, %s100
    %p102 = scmp.eq.s32.totalorder %s24, 0
    %p103 = por %p101, %p102
    %s104 = ssub.s32 %s18, %s25
    %p105 = scmp.eq.s32.totalorder %s104, 0
    %s107 = sadd.s32 %s106, 1
    %s108 = scalar_select %p105, %s106, %s107
    %p111 = pneg %p105
    %p112 = scmp.eq.s32.totalorder %s18, 1
    %p113 = por %p111, %p112
    %p114 = scmp.ne.s32.totalorder %s106, %s109
    %p115 = scmp.eq.s32.totalorder %s18, 0
    %p116 = por %p114, %p115
    %p117 = scmp.ne.s32.totalorder %s106, %s109
    %p118 = scmp.eq.s32.totalorder %s23, 1
    %p119 = por %p117, %p118
    %p120 = scmp.ne.s32.totalorder %s109, %s110
    %p121 = scmp.eq.s32.totalorder %s23, 0
    %p122 = por %p120, %p121
    %p123 = scmp.ne.s32.totalorder %s109, %s110
    %p124 = scmp.eq.s32.totalorder %s24, 1
    %p125 = por %p123, %p124
    %p127 = scmp.ne.s32.totalorder %s110, %s126
    %p128 = scmp.eq.s32.totalorder %s24, 0
    %p129 = por %p127, %p128
    %s131 = sadd.s32 %s130, 1
    %p134 = scmp.eq.s32.totalorder %s18, 1
    %p135 = scmp.ne.s32.totalorder %s130, %s132
    %p136 = scmp.eq.s32.totalorder %s18, 0
    %p137 = por %p135, %p136
    %p138 = scmp.ne.s32.totalorder %s130, %s132
    %p139 = scmp.eq.s32.totalorder %s23, 1
    %p140 = por %p138, %p139
    %p141 = scmp.ne.s32.totalorder %s132, %s133
    %p142 = scmp.eq.s32.totalorder %s23, 0
    %p143 = por %p141, %p142
    %p144 = scmp.ne.s32.totalorder %s132, %s133
    %p145 = scmp.eq.s32.totalorder %s24, 1
    %p146 = por %p144, %p145
    %p148 = scmp.ne.s32.totalorder %s133, %s147
    %p149 = scmp.eq.s32.totalorder %s24, 0
    %p150 = por %p148, %p149
    %s152 = sadd.s32 %s151, 1
    %p155 = scmp.eq.s32.totalorder %s18, 1
    %p156 = scmp.ne.s32.totalorder %s151, %s153
    %p157 = scmp.eq.s32.totalorder %s18, 0
    %p158 = por %p156, %p157
    %p159 = scmp.ne.s32.totalorder %s151, %s153
    %p160 = scmp.eq.s32.totalorder %s23, 1
    %p161 = por %p159, %p160
    %p162 = scmp.ne.s32.totalorder %s153, %s154
    %p163 = scmp.eq.s32.totalorder %s23, 0
    %p164 = por %p162, %p163
    %p165 = scmp.ne.s32.totalorder %s153, %s154
    %p166 = scmp.eq.s32.totalorder %s24, 1
    %p167 = por %p165, %p166
    %p169 = scmp.ne.s32.totalorder %s154, %s168
    %p170 = scmp.eq.s32.totalorder %s24, 0
    %p171 = por %p169, %p170
    %s173 = sadd.s32 %s172, 1
    %p176 = scmp.eq.s32.totalorder %s18, 1
    %p177 = scmp.ne.s32.totalorder %s172, %s174
    %p178 = scmp.eq.s32.totalorder %s18, 0
    %p179 = por %p177, %p178
    %p180 = scmp.ne.s32.totalorder %s172, %s174
    %p181 = scmp.eq.s32.totalorder %s23, 1
    %p182 = por %p180, %p181
    %p183 = scmp.ne.s32.totalorder %s174, %s175
    %p184 = scmp.eq.s32.totalorder %s23, 0
    %p185 = por %p183, %p184
    %p186 = scmp.ne.s32.totalorder %s174, %s175
    %p187 = scmp.eq.s32.totalorder %s24, 1
    %p188 = por %p186, %p187
    %p190 = scmp.ne.s32.totalorder %s175, %s189
    %p191 = scmp.eq.s32.totalorder %s24, 0
    %p192 = por %p190, %p191
    %s194 = sadd.s32 %s193, 1
    %p197 = scmp.eq.s32.totalorder %s18, 1
    %p198 = scmp.ne.s32.totalorder %s193, %s195
    %p199 = scmp.eq.s32.totalorder %s18, 0
    %p200 = por %p198, %p199
    %p201 = scmp.ne.s32.totalorder %s193, %s195
    %p202 = scmp.eq.s32.totalorder %s23, 1
    %p203 = por %p201, %p202
    %p204 = scmp.ne.s32.totalorder %s195, %s196
    %p205 = scmp.eq.s32.totalorder %s23, 0
    %p206 = por %p204, %p205
    %p207 = scmp.ne.s32.totalorder %s195, %s196
    %p208 = scmp.eq.s32.totalorder %s24, 1
    %p209 = por %p207, %p208
    %p211 = scmp.ne.s32.totalorder %s196, %s210
    %p212 = scmp.eq.s32.totalorder %s24, 0
    %p213 = por %p211, %p212
    %s215 = sadd.s32 %s214, 1
    %p218 = scmp.eq.s32.totalorder %s18, 1
    %p219 = scmp.ne.s32.totalorder %s214, %s216
    %p220 = scmp.eq.s32.totalorder %s18, 0
    %p221 = por %p219, %p220
    %p222 = scmp.ne.s32.totalorder %s214, %s216
    %p223 = scmp.eq.s32.totalorder %s23, 1
    %p224 = por %p222, %p223
    %p225 = scmp.ne.s32.totalorder %s216, %s217
    %p226 = scmp.eq.s32.totalorder %s23, 0
    %p227 = por %p225, %p226
    %p228 = scmp.ne.s32.totalorder %s216, %s217
    %p229 = scmp.eq.s32.totalorder %s24, 1
    %p230 = por %p228, %p229
    %p232 = scmp.ne.s32.totalorder %s217, %s231
    %p233 = scmp.eq.s32.totalorder %s24, 0
    %p234 = por %p232, %p233
    %s236 = sadd.s32 %s235, 1
    %p239 = scmp.eq.s32.totalorder %s18, 1
    %p240 = scmp.ne.s32.totalorder %s235, %s237
    %p241 = scmp.eq.s32.totalorder %s18, 0
    %p242 = por %p240, %p241
    %p243 = scmp.ne.s32.totalorder %s235, %s237
    %p244 = scmp.eq.s32.totalorder %s23, 1
    %p245 = por %p243, %p244
    %p246 = scmp.ne.s32.totalorder %s237, %s238
    %p247 = scmp.eq.s32.totalorder %s23, 0
    %p248 = por %p246, %p247
    %p249 = scmp.ne.s32.totalorder %s237, %s238
    %p250 = scmp.eq.s32.totalorder %s24, 1
    %p251 = por %p249, %p250
    %p253 = scmp.ne.s32.totalorder %s238, %s252
    %p254 = scmp.eq.s32.totalorder %s24, 0
    %p255 = por %p253, %p254
    %s256 = ssub.s32 %s18, %s25
    %p257 = scmp.eq.s32.totalorder %s256, 0
    %s259 = sadd.s32 %s258, 1
    %s260 = scalar_select %p257, %s258, %s259
    %p263 = pneg %p257
    %p264 = scmp.eq.s32.totalorder %s18, 1
    %p265 = por %p263, %p264
    %p266 = scmp.ne.s32.totalorder %s258, %s261
    %p267 = scmp.eq.s32.totalorder %s18, 0
    %p268 = por %p266, %p267
    %p269 = scmp.ne.s32.totalorder %s258, %s261
    %p270 = scmp.eq.s32.totalorder %s23, 1
    %p271 = por %p269, %p270
    %p272 = scmp.ne.s32.totalorder %s261, %s262
    %p273 = scmp.eq.s32.totalorder %s23, 0
    %p274 = por %p272, %p273
    %p275 = scmp.ne.s32.totalorder %s261, %s262
    %p276 = scmp.eq.s32.totalorder %s24, 1
    %p277 = por %p275, %p276
    %p279 = scmp.ne.s32.totalorder %s262, %s278
    %p280 = scmp.eq.s32.totalorder %s24, 0
    %p281 = por %p279, %p280
    %p282 = scmp.le.s32.totalorder 1, %s18
    %p283 = scmp.lt.s32.totalorder %s18, 3
    %p284 = pnand %p282, %p283
    %p285 = pneg %p284
    // Predicated region
    $region9: #{qnetwork_forward.1} parent=5 // pred_check
      _
    $region10: #{qnetwork_forward.1} parent=5 // pred_check_branch
      %287 = sbr.rel (%p284) target = $region12
    $region11: #{qnetwork_forward.1} parent=5 // pred_region
      %s288 = ssub.s32 %s18, 1
      // Predicated region
      $region13: #{qnetwork_forward.1} parent=11 // pred_check
        %p289 = pneg %p143
      $region14: #{qnetwork_forward.1} parent=11 // pred_check_branch
        %291 = sbr.rel (%p289) target = $region16
      $region15: #{qnetwork_forward.1} parent=11 // pred_region
        _
      $region16: #{qnetwork_forward.1} parent=11 // pred_fallthru
        _
      // Predicated region
      $region17: #{qnetwork_forward.1} parent=11 // pred_check
        %p292 = pneg %p164
      $region18: #{qnetwork_forward.1} parent=11 // pred_check_branch
        %294 = sbr.rel (%p292) target = $region20
      $region19: #{qnetwork_forward.1} parent=11 // pred_region
        _
      $region20: #{qnetwork_forward.1} parent=11 // pred_fallthru
        _
      // Predicated region
      $region21: #{qnetwork_forward.1} parent=11 // pred_check
        %p295 = pneg %p185
      $region22: #{qnetwork_forward.1} parent=11 // pred_check_branch
        %297 = sbr.rel (%p295) target = $region24
      $region23: #{qnetwork_forward.1} parent=11 // pred_region
        _
      $region24: #{qnetwork_forward.1} parent=11 // pred_fallthru
        _
      // Predicated region
      $region25: #{qnetwork_forward.1} parent=11 // pred_check
        %p298 = pneg %p206
      $region26: #{qnetwork_forward.1} parent=11 // pred_check_branch
        %300 = sbr.rel (%p298) target = $region28
      $region27: #{qnetwork_forward.1} parent=11 // pred_region
        _
      $region28: #{qnetwork_forward.1} parent=11 // pred_fallthru
        _
      // Predicated region
      $region29: #{qnetwork_forward.1} parent=11 // pred_check
        %p301 = pneg %p227
      $region30: #{qnetwork_forward.1} parent=11 // pred_check_branch
        %303 = sbr.rel (%p301) target = $region32
      $region31: #{qnetwork_forward.1} parent=11 // pred_region
        _
      $region32: #{qnetwork_forward.1} parent=11 // pred_fallthru
        _
      // Predicated region
      $region33: #{qnetwork_forward.1} parent=11 // pred_check
        %p304 = pneg %p248
      $region34: #{qnetwork_forward.1} parent=11 // pred_check_branch
        %306 = sbr.rel (%p304) target = $region36
      $region35: #{qnetwork_forward.1} parent=11 // pred_region
        _
      $region36: #{qnetwork_forward.1} parent=11 // pred_fallthru
        _
    $region12: #{qnetwork_forward.1} parent=5 // pred_fallthru
      _
    %p307 = scmp.lt.s32.totalorder %s18, 2
    // Predicated region
    $region37: #{qnetwork_forward.1} parent=5 // pred_check
      %p308 = pneg %p307
    $region38: #{qnetwork_forward.1} parent=5 // pred_check_branch
      %310 = sbr.rel (%p308) target = $region40
    $region39: #{qnetwork_forward.1} parent=5 // pred_region
      // Predicated region
      $region41: #{qnetwork_forward.1} parent=39 // pred_check
        %p311 = pneg %p38
      $region42: #{qnetwork_forward.1} parent=39 // pred_check_branch
        %313 = sbr.rel (%p311) target = $region44
      $region43: #{qnetwork_forward.1} parent=39 // pred_region
        %p314 = scmp.lt.s32.totalorder %s18, 1
        %s315 = scalar_select %p314, %s18, 1
        %s316 = smul.addr %s315, 8
        %s317 = scalar_lea.vmem %s0, %s316
      $region44: #{qnetwork_forward.1} parent=39 // pred_fallthru
        _
      // Predicated region
      $region45: #{qnetwork_forward.1} parent=39 // pred_check
        %p318 = pneg %p64
      $region46: #{qnetwork_forward.1} parent=39 // pred_check_branch
        %320 = sbr.rel (%p318) target = $region48
      $region47: #{qnetwork_forward.1} parent=39 // pred_region
        %p321 = scmp.lt.s32.totalorder %s18, 1
        %s322 = scalar_select %p321, %s18, 1
        %s323 = smul.addr %s322, 8
        %s324 = scalar_lea.vmem %s1, %s323
      $region48: #{qnetwork_forward.1} parent=39 // pred_fallthru
        _
      // Predicated region
      $region49: #{qnetwork_forward.1} parent=39 // pred_check
        %p325 = pneg %p90
      $region50: #{qnetwork_forward.1} parent=39 // pred_check_branch
        %327 = sbr.rel (%p325) target = $region52
      $region51: #{qnetwork_forward.1} parent=39 // pred_region
        %p328 = scmp.lt.s32.totalorder %s18, 1
        %s329 = scalar_select %p328, %s18, 1
        %s330 = smul.addr %s329, 8
        %s331 = scalar_lea.vmem %s2, %s330
      $region52: #{qnetwork_forward.1} parent=39 // pred_fallthru
        _
      // Predicated region
      $region53: #{qnetwork_forward.1} parent=39 // pred_check
        %p332 = pneg %p116
      $region54: #{qnetwork_forward.1} parent=39 // pred_check_branch
        %334 = sbr.rel (%p332) target = $region56
      $region55: #{qnetwork_forward.1} parent=39 // pred_region
        %p335 = scmp.lt.s32.totalorder %s18, 1
        %s336 = scalar_select %p335, %s18, 1
        %s337 = smul.addr %s336, 8
        %s338 = scalar_lea.vmem %s3, %s337
      $region56: #{qnetwork_forward.1} parent=39 // pred_fallthru
        _
    $region40: #{qnetwork_forward.1} parent=5 // pred_fallthru
      _
    %p339 = scmp.le.s32.totalorder 1, %s18
    %p340 = scmp.lt.s32.totalorder %s18, 3
    %p341 = pnand %p339, %p340
    %p342 = pneg %p341
    // Predicated region
    $region57: #{qnetwork_forward.1} parent=5 // pred_check
      _
    $region58: #{qnetwork_forward.1} parent=5 // pred_check_branch
      %344 = sbr.rel (%p341) target = $region60
    $region59: #{qnetwork_forward.1} parent=5 // pred_region
      %s345 = ssub.s32 %s18, 1
      %p346 = scmp.lt.s32.totalorder %s23, 1
      %s347 = scalar_select %p346, %s23, 1
      %s348 = smul.addr %s347, 8
      %s349 = scalar_lea.vmem %s0, %s348
      %p350 = pneg %p44
      %p351 = pneg %p41
      %p352 = scmp.lt.s32.totalorder %s23, 1
      %s353 = scalar_select %p352, %s23, 1
      %s354 = smul.addr %s353, 8
      %s355 = scalar_lea.vmem %s1, %s354
      %p356 = pneg %p70
      %p357 = pneg %p67
      %p358 = scmp.lt.s32.totalorder %s23, 1
      %s359 = scalar_select %p358, %s23, 1
      %s360 = smul.addr %s359, 8
      %s361 = scalar_lea.vmem %s2, %s360
      %p362 = pneg %p96
      %p363 = pneg %p93
      %p364 = scmp.lt.s32.totalorder %s23, 1
      %s365 = scalar_select %p364, %s23, 1
      %s366 = smul.addr %s365, 8
      %s367 = scalar_lea.vmem %s3, %s366
      %p368 = pneg %p122
      %p369 = pneg %p119
      %p370 = pneg %p143
      %p371 = pneg %p140
      %p372 = pneg %p164
      %p373 = pneg %p161
      %p374 = pneg %p185
      %p375 = pneg %p182
      %p376 = pneg %p206
      %p377 = pneg %p203
      %p378 = pneg %p227
      %p379 = pneg %p224
      %p380 = pneg %p248
      %p381 = pneg %p245
      %p382 = pneg %p274
      %p383 = pneg %p271
      %p384 = scmp.lt.s32.totalorder %s23, 1
      %s385 = scalar_select %p384, %s23, 1
      %s386 = smul.addr %s385, 8
      %s387 = scalar_lea.vmem %s10, %s386
      %p388 = scmp.lt.s32.totalorder %s23, 1
      %s389 = scalar_select %p388, %s23, 1
      %s390 = smul.addr %s389, 8
      %s391 = scalar_lea.vmem %s0, %s390
      %p392 = scmp.lt.s32.totalorder %s23, 1
      %s393 = scalar_select %p392, %s23, 1
      %s394 = smul.addr %s393, 8
      %s395 = scalar_lea.vmem %s1, %s394
      %p396 = scmp.lt.s32.totalorder %s23, 1
      %s397 = scalar_select %p396, %s23, 1
      %s398 = smul.addr %s397, 8
      %s399 = scalar_lea.vmem %s2, %s398
      %p400 = scmp.lt.s32.totalorder %s23, 1
      %s401 = scalar_select %p400, %s23, 1
      %s402 = smul.addr %s401, 8
      %s403 = scalar_lea.vmem %s3, %s402
      %p404 = scmp.lt.s32.totalorder %s23, 1
      %s405 = scalar_select %p404, %s23, 1
      %s406 = smul.addr %s405, 8
      %s407 = scalar_lea.vmem %s10, %s406
      %v408 = vld [vmem:[%s4] sm:$0x7f]
      %v409 = vld [vmem:[%s391] sm:$0xff]
      %411 = vset.pattern.permute.xlu0 0
      %412 = vperm.xlu0 %411, %v409
      %v413 = vpop.permute.xlu0 %412
      %v415 = vperm.slane %v408, 0
      %v416 = vmul.f32 %v413, %v415
      %v417 = vld [vmem:[%s395] sm:$0xff]
      %419 = vset.pattern.permute.xlu0 0
      %420 = vperm.xlu0 %419, %v417
      %v421 = vpop.permute.xlu0 %420
      %v423 = vperm.slane %v408, 1
      %v424 = vmul.f32 %v421, %v423
      %v425 = vadd.f32 %v416, %v424
      %v426 = vld [vmem:[%s399] sm:$0xff]
      %428 = vset.pattern.permute.xlu0 0
      %429 = vperm.xlu0 %428, %v426
      %v430 = vpop.permute.xlu0 %429
      %v432 = vperm.slane %v408, 2
      %v433 = vmul.f32 %v430, %v432
      %v434 = vadd.f32 %v425, %v433
      %435 = vset.pattern.permute.xlu0 1
      %436 = vperm.xlu0 %435, %v426
      %v437 = vpop.permute.xlu0 %436
      %v439 = vperm.slane %v408, 3
      %v440 = vmul.f32 %v437, %v439
      %v441 = vadd.f32 %v434, %v440
      %442 = vset.pattern.permute.xlu0 2
      %443 = vperm.xlu0 %442, %v426
      %v444 = vpop.permute.xlu0 %443
      %v446 = vperm.slane %v408, 4
      %v447 = vmul.f32 %v444, %v446
      %v448 = vadd.f32 %v441, %v447
      %449 = vset.pattern.permute.xlu0 3
      %450 = vperm.xlu0 %449, %v426
      %v451 = vpop.permute.xlu0 %450
      %v453 = vperm.slane %v408, 5
      %v454 = vmul.f32 %v451, %v453
      %v455 = vadd.f32 %v448, %v454
      %v456 = vld [vmem:[%s403] sm:$0xff]
      %458 = vset.pattern.permute.xlu0 0
      %459 = vperm.xlu0 %458, %v456
      %v460 = vpop.permute.xlu0 %459
      %v462 = vperm.slane %v408, 6
      %v463 = vmul.f32 %v460, %v462
      %v464 = vadd.f32 %v455, %v463
      %v465 = vld [vmem:[%s5] sm:$0x1]
      %v467 = vperm.slane %v465, 0
      %v469 = vadd.f32 %v464, %v467
      %v470 = vmax.f32 %v469, 0.0
      %v471 = vpack.c.bf16 %v470, %v470
      %v472 = vld [vmem:[%s6] sm:$0xf]
      %v473 = vld [vmem:[%s6 + $0x4] sm:$0xf]
      %v474 = vld [vmem:[%s6 + $0x8] sm:$0xf]
      %v475 = vld [vmem:[%s6 + $0xc] sm:$0xf]
      %v476 = vld [vmem:[%s6 + $0x10] sm:$0xf]
      %v477 = vld [vmem:[%s6 + $0x14] sm:$0xf]
      %v478 = vld [vmem:[%s6 + $0x18] sm:$0xf]
      %v479 = vld [vmem:[%s6 + $0x1c] sm:$0xf]
      %v480 = vld [vmem:[%s6 + $0x20] sm:$0xf]
      %v481 = vld [vmem:[%s6 + $0x24] sm:$0xf]
      %v482 = vld [vmem:[%s6 + $0x28] sm:$0xf]
      %v483 = vld [vmem:[%s6 + $0x2c] sm:$0xf]
      %v484 = vld [vmem:[%s6 + $0x30] sm:$0xf]
      %v485 = vld [vmem:[%s6 + $0x34] sm:$0xf]
      %v486 = vld [vmem:[%s6 + $0x38] sm:$0xf]
      %v487 = vld [vmem:[%s6 + $0x3c] sm:$0xf]
      %v488 = vld [vmem:[%s7] sm:$0x1]
      %v490 = vperm.slane %v488, 0
      %v508 = vunpack.c.l.b16 %v472
      %v509 = vunpack.c.l.b16 %v473
      %v510 = vunpack.c.l.b16 %v474
      %v511 = vunpack.c.l.b16 %v475
      %v512 = vunpack.c.l.b16 %v476
      %v513 = vunpack.c.l.b16 %v477
      %v514 = vunpack.c.l.b16 %v478
      %v515 = vunpack.c.l.b16 %v479
      %v516 = vunpack.c.l.b16 %v480
      %v517 = vunpack.c.l.b16 %v481
      %v518 = vunpack.c.l.b16 %v482
      %v519 = vunpack.c.l.b16 %v483
      %v520 = vunpack.c.l.b16 %v484
      %v521 = vunpack.c.l.b16 %v485
      %v522 = vunpack.c.l.b16 %v486
      %v523 = vunpack.c.l.b16 %v487
      %v524 = vpack.c.b16 %v509, %v508
      %v525 = vpack.c.b16 %v511, %v510
      %v526 = vpack.c.b16 %v513, %v512
      %v527 = vpack.c.b16 %v515, %v514
      %v528 = vpack.c.b16 %v517, %v516
      %v529 = vpack.c.b16 %v519, %v518
      %v530 = vpack.c.b16 %v521, %v520
      %v531 = vpack.c.b16 %v523, %v522
      %540 = vmatpush.bf16.msra.mxu0 %v531
      %541 = vmatpush.bf16.msra.mxu0 %v530
      %542 = vmatpush.bf16.msra.mxu0 %v529
      %543 = vmatpush.bf16.msra.mxu0 %v528
      %544 = vmatpush.bf16.msra.mxu0 %v527
      %545 = vmatpush.bf16.msra.mxu0 %v526
      %546 = vmatpush.bf16.msra.mxu0 %v525
      %547 = vmatpush.bf16.msra.mxu0 %v524
      %548 = vmatmul.bf16.gmra.mxu0 %v471
      %v549 = vpop.f32.mrf.mxu0
      %v550 = vadd.f32 %v490, %v549
      %v551 = vpop.f32.mrf.mxu0
      %552 = vdwg.mxu0
      %v553 = vmax.f32 %v550, 0.0
      %v554 = vpack.c.bf16 %v553, %v553
      %v555 = vld [vmem:[%s8] sm:$0xf]
      %v556 = vld [vmem:[%s8 + $0x4] sm:$0xf]
      %v557 = vld [vmem:[%s8 + $0x8] sm:$0xf]
      %v558 = vld [vmem:[%s8 + $0xc] sm:$0xf]
      %v559 = vld [vmem:[%s8 + $0x10] sm:$0xf]
      %v560 = vld [vmem:[%s8 + $0x14] sm:$0xf]
      %v561 = vld [vmem:[%s8 + $0x18] sm:$0xf]
      %v562 = vld [vmem:[%s8 + $0x1c] sm:$0xf]
      %v563 = vld [vmem:[%s8 + $0x20] sm:$0xf]
      %v564 = vld [vmem:[%s8 + $0x24] sm:$0xf]
      %v565 = vld [vmem:[%s8 + $0x28] sm:$0xf]
      %v566 = vld [vmem:[%s8 + $0x2c] sm:$0xf]
      %v567 = vld [vmem:[%s8 + $0x30] sm:$0xf]
      %v568 = vld [vmem:[%s8 + $0x34] sm:$0xf]
      %v569 = vld [vmem:[%s8 + $0x38] sm:$0xf]
      %v570 = vld [vmem:[%s8 + $0x3c] sm:$0xf]
      %v571 = vld [vmem:[#allocation2] sm:$0x1]
      %v573 = vperm.slane %v571, 0
      %v591 = vunpack.c.l.b16 %v555
      %v592 = vunpack.c.l.b16 %v556
      %v593 = vunpack.c.l.b16 %v557
      %v594 = vunpack.c.l.b16 %v558
      %v595 = vunpack.c.l.b16 %v559
      %v596 = vunpack.c.l.b16 %v560
      %v597 = vunpack.c.l.b16 %v561
      %v598 = vunpack.c.l.b16 %v562
      %v599 = vunpack.c.l.b16 %v563
      %v600 = vunpack.c.l.b16 %v564
      %v601 = vunpack.c.l.b16 %v565
      %v602 = vunpack.c.l.b16 %v566
      %v603 = vunpack.c.l.b16 %v567
      %v604 = vunpack.c.l.b16 %v568
      %v605 = vunpack.c.l.b16 %v569
      %v606 = vunpack.c.l.b16 %v570
      %v607 = vpack.c.b16 %v592, %v591
      %v608 = vpack.c.b16 %v594, %v593
      %v609 = vpack.c.b16 %v596, %v595
      %v610 = vpack.c.b16 %v598, %v597
      %v611 = vpack.c.b16 %v600, %v599
      %v612 = vpack.c.b16 %v602, %v601
      %v613 = vpack.c.b16 %v604, %v603
      %v614 = vpack.c.b16 %v606, %v605
      %623 = vmatpush.bf16.msra.mxu0 %v614
      %624 = vmatpush.bf16.msra.mxu0 %v613
      %625 = vmatpush.bf16.msra.mxu0 %v612
      %626 = vmatpush.bf16.msra.mxu0 %v611
      %627 = vmatpush.bf16.msra.mxu0 %v610
      %628 = vmatpush.bf16.msra.mxu0 %v609
      %629 = vmatpush.bf16.msra.mxu0 %v608
      %630 = vmatpush.bf16.msra.mxu0 %v607
      %631 = vmatmul.bf16.gmra.mxu0 %v554
      %v632 = vpop.f32.mrf.mxu0
      %v633 = vadd.f32 %v573, %v632
      %v634 = vpop.f32.mrf.mxu0
      %635 = vdwg.mxu0
      %vm636 = vcmask 7168
      %637 = vst.msk [vmem:[%s407] sm:$0xff] %vm636, %v633
      %p638 = scmp.lt.s32.totalorder %s23, 1
      %s639 = scalar_select %p638, %s23, 1
      %s640 = smul.addr %s639, 8
      %s641 = scalar_lea.vmem %s10, %s640
      // Predicated region
      $region61: #{qnetwork_forward.1} parent=59 // pred_check
        %p642 = pneg %p271
      $region62: #{qnetwork_forward.1} parent=59 // pred_check_branch
        %644 = sbr.rel (%p642) target = $region64
      $region63: #{qnetwork_forward.1} parent=59 // pred_region
        _
      $region64: #{qnetwork_forward.1} parent=59 // pred_fallthru
        _
    $region60: #{qnetwork_forward.1} parent=5 // pred_fallthru
      _
    %p645 = scmp.le.s32.totalorder 2, %s18
    // Predicated region
    $region65: #{qnetwork_forward.1} parent=5 // pred_check
      %p646 = pneg %p645
    $region66: #{qnetwork_forward.1} parent=5 // pred_check_branch
      %648 = sbr.rel (%p646) target = $region68
    $region67: #{qnetwork_forward.1} parent=5 // pred_region
      %s649 = ssub.s32 %s18, 2
      // Predicated region
      $region69: #{qnetwork_forward.1} parent=67 // pred_check
        %p650 = pneg %p277
      $region70: #{qnetwork_forward.1} parent=67 // pred_check_branch
        %652 = sbr.rel (%p650) target = $region72
      $region71: #{qnetwork_forward.1} parent=67 // pred_region
        %p653 = scmp.lt.s32.totalorder %s24, 1
        %s654 = scalar_select %p653, %s24, 1
        %s655 = smul.addr %s654, 8
        %s656 = scalar_lea.vmem %s10, %s655
      $region72: #{qnetwork_forward.1} parent=67 // pred_fallthru
        _
    $region68: #{qnetwork_forward.1} parent=5 // pred_fallthru
      _
  $region6: #{qnetwork_forward.1} parent=0 // loop_footer
    %s22 = sadd.s32 1, %s18
  $region7: #{qnetwork_forward.1} parent=0 // loop_footer_branch
    %17 = sbr.rel target = $region3
  $region8: #{qnetwork_forward.1} parent=0 // loop_exit
    _

</llo_original>
